<compile_context>
chip_gen: v6e
topology: v6e:2x2x1
jax: 0.10.0
libtpu: 0.0.40
codegen_flags: <defaults>
</compile_context>

<pallas_src>
import jax
import jax.numpy as jnp
from jax.experimental import pallas as pl
from jax.experimental.pallas import tpu as pltpu


def _pos_embed_kernel(x_ref, w1_ref, shift1_ref, w2_ref, b2_ref, o_ref):
    # x_ref: (1, C_in, TN) block (channel-first, positions on lanes).
    x = x_ref[0]                                            # (C_in, TN), bf16

    # Conv1d(C_in->F, k=1) + bias + BatchNorm (folded) : relu(W1' @ x + shift')
    h = jnp.dot(w1_ref[...], x,
                preferred_element_type=jnp.float32)         # (F, TN), f32 acc
    h = jnp.maximum(h + shift1_ref[...], 0.0)               # (F, 1) broadcast

    # Conv1d(F->F, k=1) : W2 @ h + b2  -> already in (F, TN) output layout.
    out = jnp.dot(w2_ref[...], h.astype(w2_ref.dtype),
                  preferred_element_type=jnp.float32)       # (F, TN)
    o_ref[0] = (out + b2_ref[...]).astype(o_ref.dtype)


def _choose_n_tile(n):
    """Largest lane-friendly tile that divides N; fall back to full extent."""
    if n % 8 == 0:
        for t in (1024, 512, 256, 128):
            if n % t == 0:
                return t
    # Full extent is always a legal block shape.
    # TODO(synk): pad N to a multiple of 128 for very large, oddly-sized N.
    return n


def position_embedding_learned(xyz, params, *, matmul_dtype=jnp.bfloat16):
    """xyz: (B, N, C_in) float32 -> (B, F, N), matching the PyTorch module."""
    w1, b1, gamma, beta, running_mean, running_var, w2, b2 = params
    B, N, C_in = xyz.shape
    F = w1.shape[0]
    eps = 1e-5

    # Fold Conv1 bias + eval-mode BN into the first weight/shift:
    #   BN(x@W1^T + b1) = (x @ (scale*W1)^T) + (scale*b1 + beta - mean*scale)
    scale = gamma / jnp.sqrt(running_var + eps)                       # (F,)
    w1_folded = (scale[:, None] * w1).astype(matmul_dtype)            # (F, C_in)
    shift1 = (scale * b1 + beta - running_mean * scale)
    shift1 = shift1.astype(jnp.float32).reshape(F, 1)                 # (F, 1)
    w2_c = w2.astype(matmul_dtype)                                    # (F, F)
    b2_c = b2.astype(jnp.float32).reshape(F, 1)                       # (F, 1)

    # Channel-first input (what PyTorch's .transpose(1, 2) produces). This is a
    # tiny tensor (C_in channels) compared to the F-wide output, so doing the
    # transpose + bf16 cast in XLA here is negligible HBM traffic.
    x_t = jnp.transpose(xyz, (0, 2, 1)).astype(matmul_dtype)          # (B, C_in, N)

    tn = _choose_n_tile(N)
    grid = (B, N // tn)

    out = pl.pallas_call(
        _pos_embed_kernel,
        out_shape=jax.ShapeDtypeStruct((B, F, N), xyz.dtype),
        grid=grid,
        in_specs=[
            pl.BlockSpec((1, C_in, tn), lambda b, n: (b, 0, n)),   # x (tiled)
            pl.BlockSpec((F, C_in), lambda b, n: (0, 0)),          # W1 folded (resident)
            pl.BlockSpec((F, 1), lambda b, n: (0, 0)),             # folded bias/BN shift
            pl.BlockSpec((F, F), lambda b, n: (0, 0)),             # W2 (resident)
            pl.BlockSpec((F, 1), lambda b, n: (0, 0)),             # b2
        ],
        out_specs=pl.BlockSpec((1, F, tn), lambda b, n: (b, 0, n)),
        compiler_params=pltpu.CompilerParams(
            dimension_semantics=("parallel", "parallel")),
    )(x_t, w1_folded, shift1, w2_c, b2_c)

    return out                                                        # (B, F, N)


def _reference(xyz, params):
    w1, b1, gamma, beta, running_mean, running_var, w2, b2 = params
    eps = 1e-5
    h = jnp.einsum('bnc,fc->bnf', xyz, w1) + b1
    h = (h - running_mean) / jnp.sqrt(running_var + eps) * gamma + beta
    h = jnp.maximum(h, 0.0)
    out = jnp.einsum('bnf,gf->bng', h, w2) + b2
    return jnp.transpose(out, (0, 2, 1))                              # (B, F, N)


if __name__ == "__main__":
    B, N, C_in, F = 2, 8, 4, 32   # small shapes: batch=2, seq=8, in_ch=4, feats=32

    key = jax.random.PRNGKey(0)
    ks = jax.random.split(key, 9)

    xyz = jax.random.normal(ks[0], (B, N, C_in), dtype=jnp.float32)

    # Deterministic synthetic parameters (shapes follow the nn.Module __init__).
    w1 = jax.random.normal(ks[1], (F, C_in), dtype=jnp.float32) * 0.1   # Conv1d(C_in,F,1)
    b1 = jax.random.normal(ks[2], (F,), dtype=jnp.float32) * 0.1
    gamma = 1.0 + 0.1 * jax.random.normal(ks[3], (F,), dtype=jnp.float32)  # BN weight
    beta = 0.1 * jax.random.normal(ks[4], (F,), dtype=jnp.float32)         # BN bias
    running_mean = 0.1 * jax.random.normal(ks[5], (F,), dtype=jnp.float32)
    running_var = jnp.abs(jax.random.normal(ks[6], (F,), dtype=jnp.float32)) + 0.5
    w2 = jax.random.normal(ks[7], (F, F), dtype=jnp.float32) * 0.1       # Conv1d(F,F,1)
    b2 = jax.random.normal(ks[8], (F,), dtype=jnp.float32) * 0.1

    params = (w1, b1, gamma, beta, running_mean, running_var, w2, b2)

    out = position_embedding_learned(xyz, params)
    out = jax.block_until_ready(out)

    ref = _reference(xyz, params)
    assert out.shape == (B, F, N), out.shape
    # bf16 matmuls with f32 accumulation: tolerance sized for bf16 mantissa.
    assert jnp.allclose(out, ref, atol=3e-2, rtol=3e-2), "mismatch vs reference"

    print("KERNEL_OK")
</pallas_src>

<mosaic_0001>
module attributes {stable_mosaic.version = 11 : i64} {
  func.func @_pos_embed_kernel(%arg0: i32, %arg1: i32, %arg2: memref<1x4x8xbf16, #tpu.memory_space<vmem>>, %arg3: memref<32x4xbf16, #tpu.memory_space<vmem>>, %arg4: memref<32x1xf32, #tpu.memory_space<vmem>>, %arg5: memref<32x32xbf16, #tpu.memory_space<vmem>>, %arg6: memref<32x1xf32, #tpu.memory_space<vmem>>, %arg7: memref<1x32x8xf32, #tpu.memory_space<vmem>>) attributes {dimension_semantics = [#tpu.dimension_semantics<parallel>, #tpu.dimension_semantics<parallel>], iteration_bounds = array<i64: 2, 1>, scalar_prefetch = 0 : i64, scratch_operands = 0 : i64, tpu.core_type = #tpu.core_type<tc>, window_params = [{transform_indices = @transform_0, window_bounds = array<i64: 1, 4, 8>}, {pipeline_mode = #tpu.pipeline_mode<synchronous>, transform_indices = @transform_1, window_bounds = array<i64: 32, 4>}, {pipeline_mode = #tpu.pipeline_mode<synchronous>, transform_indices = @transform_2, window_bounds = array<i64: 32, 1>}, {pipeline_mode = #tpu.pipeline_mode<synchronous>, transform_indices = @transform_3, window_bounds = array<i64: 32, 32>}, {pipeline_mode = #tpu.pipeline_mode<synchronous>, transform_indices = @transform_4, window_bounds = array<i64: 32, 1>}, {transform_indices = @transform_5, window_bounds = array<i64: 1, 32, 8>}]} {
    %c0 = arith.constant 0 : index
    %c0_0 = arith.constant 0 : index
    %c0_1 = arith.constant 0 : index
    %0 = vector.load %arg2[%c0, %c0_0, %c0_1] : memref<1x4x8xbf16, #tpu.memory_space<vmem>>, vector<1x4x8xbf16>
    %1 = vector.shape_cast %0 : vector<1x4x8xbf16> to vector<4x8xbf16>
    %c0_2 = arith.constant 0 : index
    %c0_3 = arith.constant 0 : index
    %2 = vector.load %arg3[%c0_2, %c0_3] : memref<32x4xbf16, #tpu.memory_space<vmem>>, vector<32x4xbf16>
    %cst = arith.constant dense<0.000000e+00> : vector<32x8xf32>
    %3 = tpu.matmul %2, %1, %cst {dimension_numbers = #tpu.dot_dimension_numbers<[1], [0], [0], [1], [0, 0, 1, 1], [], []>} : vector<32x4xbf16>, vector<4x8xbf16>, vector<32x8xf32> -> vector<32x8xf32>
    %c0_4 = arith.constant 0 : index
    %c0_5 = arith.constant 0 : index
    %4 = vector.load %arg4[%c0_4, %c0_5] : memref<32x1xf32, #tpu.memory_space<vmem>>, vector<32x1xf32>
    %5 = vector.broadcast %4 : vector<32x1xf32> to vector<32x8xf32>
    %6 = arith.addf %3, %5 : vector<32x8xf32>
    %cst_6 = arith.constant 0.000000e+00 : f32
    %7 = vector.broadcast %cst_6 : f32 to vector<32x8xf32>
    %8 = arith.maximumf %6, %7 : vector<32x8xf32>
    %c0_7 = arith.constant 0 : index
    %c0_8 = arith.constant 0 : index
    %9 = vector.load %arg5[%c0_7, %c0_8] : memref<32x32xbf16, #tpu.memory_space<vmem>>, vector<32x32xbf16>
    %10 = arith.truncf %8 : vector<32x8xf32> to vector<32x8xbf16>
    %cst_9 = arith.constant dense<0.000000e+00> : vector<32x8xf32>
    %11 = tpu.matmul %9, %10, %cst_9 {dimension_numbers = #tpu.dot_dimension_numbers<[1], [0], [0], [1], [0, 0, 1, 1], [], []>} : vector<32x32xbf16>, vector<32x8xbf16>, vector<32x8xf32> -> vector<32x8xf32>
    %c0_10 = arith.constant 0 : index
    %c0_11 = arith.constant 0 : index
    %12 = vector.load %arg6[%c0_10, %c0_11] : memref<32x1xf32, #tpu.memory_space<vmem>>, vector<32x1xf32>
    %13 = vector.broadcast %12 : vector<32x1xf32> to vector<32x8xf32>
    %14 = arith.addf %11, %13 : vector<32x8xf32>
    %c0_12 = arith.constant 0 : index
    %c0_13 = arith.constant 0 : index
    %c0_14 = arith.constant 0 : index
    %15 = vector.load %arg7[%c0_12, %c0_13, %c0_14] : memref<1x32x8xf32, #tpu.memory_space<vmem>>, vector<1x32x8xf32>
    %16 = vector.shape_cast %15 : vector<1x32x8xf32> to vector<32x8xf32>
    %17 = vector.shape_cast %14 : vector<32x8xf32> to vector<1x32x8xf32>
    tpu.vector_store %arg7[%c0_12, %c0_13, %c0_14], %17 {strides = array<i32>} : memref<1x32x8xf32, #tpu.memory_space<vmem>>, vector<1x32x8xf32>,
    return
  }
  func.func @transform_0(%arg0: i32, %arg1: i32) -> (i32, i32, i32) {
    %c0_i32 = arith.constant 0 : i32
    %c0_i32_0 = arith.constant 0 : i32
    return %arg0, %c0_i32, %arg1 : i32, i32, i32
  }
  func.func @transform_1(%arg0: i32, %arg1: i32) -> (i32, i32) {
    %c0_i32 = arith.constant 0 : i32
    %c0_i32_0 = arith.constant 0 : i32
    %c0_i32_1 = arith.constant 0 : i32
    return %c0_i32, %c0_i32_0 : i32, i32
  }
  func.func @transform_2(%arg0: i32, %arg1: i32) -> (i32, i32) {
    %c0_i32 = arith.constant 0 : i32
    %c0_i32_0 = arith.constant 0 : i32
    %c0_i32_1 = arith.constant 0 : i32
    return %c0_i32, %c0_i32_0 : i32, i32
  }
  func.func @transform_3(%arg0: i32, %arg1: i32) -> (i32, i32) {
    %c0_i32 = arith.constant 0 : i32
    %c0_i32_0 = arith.constant 0 : i32
    %c0_i32_1 = arith.constant 0 : i32
    return %c0_i32, %c0_i32_0 : i32, i32
  }
  func.func @transform_4(%arg0: i32, %arg1: i32) -> (i32, i32) {
    %c0_i32 = arith.constant 0 : i32
    %c0_i32_0 = arith.constant 0 : i32
    %c0_i32_1 = arith.constant 0 : i32
    return %c0_i32, %c0_i32_0 : i32, i32
  }
  func.func @transform_5(%arg0: i32, %arg1: i32) -> (i32, i32, i32) {
    %c0_i32 = arith.constant 0 : i32
    %c0_i32_0 = arith.constant 0 : i32
    return %arg0, %c0_i32, %arg1 : i32, i32, i32
  }
}

</mosaic_0001>

<llo_original>
// kernel: tpu_custom_call.1
$region0: #{tpu_custom_call.1}
  #allocation0 [shape = 'u32[]', space=smem, size = 0x4, offset = 0x4, fixed_abs, tag = 'smem constant byte address 0x4 - core index']
  #allocation1 [shape = 'u32[144,128]{1,0:T(1,128)}', space=vmem, size = 0x12000, scoped, tag = 'internal scratch']
  %s0 = inlined_call_operand.vmem [shape: bf16[2,4,8], index: 0, kind: input, shape index: {}]
  %s1 = inlined_call_operand.vmem [shape: bf16[32,4], index: 1, kind: input, shape index: {}]
  %s2 = inlined_call_operand.vmem [shape: f32[32,1], index: 2, kind: input, shape index: {}]
  %s3 = inlined_call_operand.vmem [shape: bf16[32,32], index: 3, kind: input, shape index: {}]
  %s4 = inlined_call_operand.vmem [shape: f32[32,1], index: 4, kind: input, shape index: {}]
  %s5 = inlined_call_operand.vmem [shape: f32[2,32,8], index: 5, kind: output, shape index: {}]
  %s6 = sld [smem:[#allocation0]]
  $region53: #{tpu_custom_call.1} parent=0
    _
  %s8 = ssub.s32 1, %s6
  %s9 = scalar_select 0, %s8, %s6
  loop: start=0, step=1, limit=4
  $region2: #{tpu_custom_call.1} parent=0 // loop_pre_header
    _
  $region3: #{tpu_custom_call.1} parent=0 // loop_header
    %s11 = sphi 0, %s15
    %p12 = scmp.ge.s32.totalorder %s11, 4
    %s18 = sphi 0, %s30
    %s19 = sphi 0, %s26
    %s20 = sphi 0, %s18
    %s21 = sphi 0, %s19
    %s22 = sphi 0, %s20
    %s23 = sphi 0, %s21
    %s35 = sphi 0, %s37
    %s38 = sphi 0, %s35
    %s39 = sphi 0, %s38
    %s55 = sphi 0, %s39
    %s59 = sphi 0, %s59
    %s61 = sphi 0, %s59
    %s62 = sphi 0, %s61
    %s76 = sphi 0, %s62
    %s80 = sphi 0, %s80
    %s82 = sphi 0, %s80
    %s83 = sphi 0, %s82
    %s97 = sphi 0, %s83
    %s101 = sphi 0, %s101
    %s103 = sphi 0, %s101
    %s104 = sphi 0, %s103
    %s118 = sphi 0, %s104
    %s122 = sphi 0, %s122
    %s124 = sphi 0, %s122
    %s125 = sphi 0, %s124
    %s139 = sphi 0, %s125
    %s147 = sphi 0, %s149
    %s150 = sphi 0, %s147
    %s151 = sphi 0, %s150
    %s167 = sphi 0, %s151
  $region4: #{tpu_custom_call.1} parent=0 // loop_header_branch
    %14 = sbr.rel (%p12) target = $region8
  $region5: #{tpu_custom_call.1} parent=0 // loop_body
    %s16 = ssub.s32 %s11, 1
    %s17 = ssub.s32 %s11, 2
    %s24 = sadd.s32 1, %s19
    %p25 = scmp.ge.s32.totalorder %s24, 1
    %s26 = scalar_select %p25, 0, %s24
    %s27 = sadd.s32 1, %s18
    %s28 = scalar_select %p25, %s27, %s18
    %p29 = scmp.ge.s32.totalorder %s28, 2
    %s30 = scalar_select %p29, 0, %s28
    %s31 = ssub.s32 %s18, %s30
    %s32 = ssub.s32 %s19, %s26
    %s33 = sor.u32 %s31, %s32
    %p34 = scmp.eq.s32.totalorder %s33, 0
    %s36 = sadd.s32 %s35, 1
    %s37 = scalar_select %p34, %s35, %s36
    %p40 = pneg %p34
    %p41 = scmp.eq.s32.totalorder %s11, 1
    %p42 = por %p40, %p41
    %p43 = scmp.ne.s32.totalorder %s35, %s38
    %p44 = scmp.eq.s32.totalorder %s11, 0
    %p45 = por %p43, %p44
    %p46 = scmp.ne.s32.totalorder %s35, %s38
    %p47 = scmp.eq.s32.totalorder %s16, 1
    %p48 = por %p46, %p47
    %p49 = scmp.ne.s32.totalorder %s38, %s39
    %p50 = scmp.eq.s32.totalorder %s16, 0
    %p51 = por %p49, %p50
    %p52 = scmp.ne.s32.totalorder %s38, %s39
    %p53 = scmp.eq.s32.totalorder %s17, 1
    %p54 = por %p52, %p53
    %p56 = scmp.ne.s32.totalorder %s39, %s55
    %p57 = scmp.eq.s32.totalorder %s17, 0
    %p58 = por %p56, %p57
    %s60 = sadd.s32 %s59, 1
    %p63 = scmp.eq.s32.totalorder %s11, 1
    %p64 = scmp.ne.s32.totalorder %s59, %s61
    %p65 = scmp.eq.s32.totalorder %s11, 0
    %p66 = por %p64, %p65
    %p67 = scmp.ne.s32.totalorder %s59, %s61
    %p68 = scmp.eq.s32.totalorder %s16, 1
    %p69 = por %p67, %p68
    %p70 = scmp.ne.s32.totalorder %s61, %s62
    %p71 = scmp.eq.s32.totalorder %s16, 0
    %p72 = por %p70, %p71
    %p73 = scmp.ne.s32.totalorder %s61, %s62
    %p74 = scmp.eq.s32.totalorder %s17, 1
    %p75 = por %p73, %p74
    %p77 = scmp.ne.s32.totalorder %s62, %s76
    %p78 = scmp.eq.s32.totalorder %s17, 0
    %p79 = por %p77, %p78
    %s81 = sadd.s32 %s80, 1
    %p84 = scmp.eq.s32.totalorder %s11, 1
    %p85 = scmp.ne.s32.totalorder %s80, %s82
    %p86 = scmp.eq.s32.totalorder %s11, 0
    %p87 = por %p85, %p86
    %p88 = scmp.ne.s32.totalorder %s80, %s82
    %p89 = scmp.eq.s32.totalorder %s16, 1
    %p90 = por %p88, %p89
    %p91 = scmp.ne.s32.totalorder %s82, %s83
    %p92 = scmp.eq.s32.totalorder %s16, 0
    %p93 = por %p91, %p92
    %p94 = scmp.ne.s32.totalorder %s82, %s83
    %p95 = scmp.eq.s32.totalorder %s17, 1
    %p96 = por %p94, %p95
    %p98 = scmp.ne.s32.totalorder %s83, %s97
    %p99 = scmp.eq.s32.totalorder %s17, 0
    %p100 = por %p98, %p99
    %s102 = sadd.s32 %s101, 1
    %p105 = scmp.eq.s32.totalorder %s11, 1
    %p106 = scmp.ne.s32.totalorder %s101, %s103
    %p107 = scmp.eq.s32.totalorder %s11, 0
    %p108 = por %p106, %p107
    %p109 = scmp.ne.s32.totalorder %s101, %s103
    %p110 = scmp.eq.s32.totalorder %s16, 1
    %p111 = por %p109, %p110
    %p112 = scmp.ne.s32.totalorder %s103, %s104
    %p113 = scmp.eq.s32.totalorder %s16, 0
    %p114 = por %p112, %p113
    %p115 = scmp.ne.s32.totalorder %s103, %s104
    %p116 = scmp.eq.s32.totalorder %s17, 1
    %p117 = por %p115, %p116
    %p119 = scmp.ne.s32.totalorder %s104, %s118
    %p120 = scmp.eq.s32.totalorder %s17, 0
    %p121 = por %p119, %p120
    %s123 = sadd.s32 %s122, 1
    %p126 = scmp.eq.s32.totalorder %s11, 1
    %p127 = scmp.ne.s32.totalorder %s122, %s124
    %p128 = scmp.eq.s32.totalorder %s11, 0
    %p129 = por %p127, %p128
    %p130 = scmp.ne.s32.totalorder %s122, %s124
    %p131 = scmp.eq.s32.totalorder %s16, 1
    %p132 = por %p130, %p131
    %p133 = scmp.ne.s32.totalorder %s124, %s125
    %p134 = scmp.eq.s32.totalorder %s16, 0
    %p135 = por %p133, %p134
    %p136 = scmp.ne.s32.totalorder %s124, %s125
    %p137 = scmp.eq.s32.totalorder %s17, 1
    %p138 = por %p136, %p137
    %p140 = scmp.ne.s32.totalorder %s125, %s139
    %p141 = scmp.eq.s32.totalorder %s17, 0
    %p142 = por %p140, %p141
    %s143 = ssub.s32 %s18, %s30
    %s144 = ssub.s32 %s19, %s26
    %s145 = sor.u32 %s143, %s144
    %p146 = scmp.eq.s32.totalorder %s145, 0
    %s148 = sadd.s32 %s147, 1
    %s149 = scalar_select %p146, %s147, %s148
    %p152 = pneg %p146
    %p153 = scmp.eq.s32.totalorder %s11, 1
    %p154 = por %p152, %p153
    %p155 = scmp.ne.s32.totalorder %s147, %s150
    %p156 = scmp.eq.s32.totalorder %s11, 0
    %p157 = por %p155, %p156
    %p158 = scmp.ne.s32.totalorder %s147, %s150
    %p159 = scmp.eq.s32.totalorder %s16, 1
    %p160 = por %p158, %p159
    %p161 = scmp.ne.s32.totalorder %s150, %s151
    %p162 = scmp.eq.s32.totalorder %s16, 0
    %p163 = por %p161, %p162
    %p164 = scmp.ne.s32.totalorder %s150, %s151
    %p165 = scmp.eq.s32.totalorder %s17, 1
    %p166 = por %p164, %p165
    %p168 = scmp.ne.s32.totalorder %s151, %s167
    %p169 = scmp.eq.s32.totalorder %s17, 0
    %p170 = por %p168, %p169
    %p171 = scmp.le.s32.totalorder 1, %s11
    %p172 = scmp.lt.s32.totalorder %s11, 3
    %p173 = pnand %p171, %p172
    %p174 = pneg %p173
    // Predicated region
    $region9: #{tpu_custom_call.1} parent=5 // pred_check
      _
    $region10: #{tpu_custom_call.1} parent=5 // pred_check_branch
      %176 = sbr.rel (%p173) target = $region12
    $region11: #{tpu_custom_call.1} parent=5 // pred_region
      %s177 = ssub.s32 %s11, 1
      // Predicated region
      $region13: #{tpu_custom_call.1} parent=11 // pred_check
        %p178 = pneg %p72
      $region14: #{tpu_custom_call.1} parent=11 // pred_check_branch
        %180 = sbr.rel (%p178) target = $region16
      $region15: #{tpu_custom_call.1} parent=11 // pred_region
        _
      $region16: #{tpu_custom_call.1} parent=11 // pred_fallthru
        _
      // Predicated region
      $region17: #{tpu_custom_call.1} parent=11 // pred_check
        %p181 = pneg %p93
      $region18: #{tpu_custom_call.1} parent=11 // pred_check_branch
        %183 = sbr.rel (%p181) target = $region20
      $region19: #{tpu_custom_call.1} parent=11 // pred_region
        _
      $region20: #{tpu_custom_call.1} parent=11 // pred_fallthru
        _
      // Predicated region
      $region21: #{tpu_custom_call.1} parent=11 // pred_check
        %p184 = pneg %p114
      $region22: #{tpu_custom_call.1} parent=11 // pred_check_branch
        %186 = sbr.rel (%p184) target = $region24
      $region23: #{tpu_custom_call.1} parent=11 // pred_region
        _
      $region24: #{tpu_custom_call.1} parent=11 // pred_fallthru
        _
      // Predicated region
      $region25: #{tpu_custom_call.1} parent=11 // pred_check
        %p187 = pneg %p135
      $region26: #{tpu_custom_call.1} parent=11 // pred_check_branch
        %189 = sbr.rel (%p187) target = $region28
      $region27: #{tpu_custom_call.1} parent=11 // pred_region
        _
      $region28: #{tpu_custom_call.1} parent=11 // pred_fallthru
        _
    $region12: #{tpu_custom_call.1} parent=5 // pred_fallthru
      _
    %p190 = scmp.lt.s32.totalorder %s11, 2
    // Predicated region
    $region29: #{tpu_custom_call.1} parent=5 // pred_check
      %p191 = pneg %p190
    $region30: #{tpu_custom_call.1} parent=5 // pred_check_branch
      %193 = sbr.rel (%p191) target = $region32
    $region31: #{tpu_custom_call.1} parent=5 // pred_region
      // Predicated region
      $region33: #{tpu_custom_call.1} parent=31 // pred_check
        %p194 = pneg %p45
      $region34: #{tpu_custom_call.1} parent=31 // pred_check_branch
        %196 = sbr.rel (%p194) target = $region36
      $region35: #{tpu_custom_call.1} parent=31 // pred_region
        %p197 = scmp.lt.s32.totalorder %s18, 1
        %s198 = scalar_select %p197, %s18, 1
        %p199 = scmp.lt.s32.totalorder %s19, 0
        %s200 = scalar_select %p199, %s19, 0
        %s201 = sadd.s32 %s200, %s198
        %s202 = smul.addr %s201, 2
        %s203 = scalar_lea.vmem %s0, %s202
      $region36: #{tpu_custom_call.1} parent=31 // pred_fallthru
        _
    $region32: #{tpu_custom_call.1} parent=5 // pred_fallthru
      _
    %p204 = scmp.le.s32.totalorder 1, %s11
    %p205 = scmp.lt.s32.totalorder %s11, 3
    %p206 = pnand %p204, %p205
    %p207 = pneg %p206
    // Predicated region
    $region37: #{tpu_custom_call.1} parent=5 // pred_check
      _
    $region38: #{tpu_custom_call.1} parent=5 // pred_check_branch
      %209 = sbr.rel (%p206) target = $region40
    $region39: #{tpu_custom_call.1} parent=5 // pred_region
      %s210 = ssub.s32 %s11, 1
      %p211 = scmp.lt.s32.totalorder %s20, 1
      %s212 = scalar_select %p211, %s20, 1
      %p213 = scmp.lt.s32.totalorder %s21, 0
      %s214 = scalar_select %p213, %s21, 0
      %s215 = sadd.s32 %s214, %s212
      %s216 = smul.addr %s215, 2
      %s217 = scalar_lea.vmem %s0, %s216
      %p218 = pneg %p51
      %p219 = pneg %p48
      %p220 = pneg %p72
      %p221 = pneg %p69
      %p222 = pneg %p93
      %p223 = pneg %p90
      %p224 = pneg %p114
      %p225 = pneg %p111
      %p226 = pneg %p135
      %p227 = pneg %p132
      %p228 = pneg %p163
      %p229 = pneg %p160
      %p230 = scmp.lt.s32.totalorder %s20, 1
      %s231 = scalar_select %p230, %s20, 1
      %p232 = scmp.lt.s32.totalorder %s21, 0
      %s233 = scalar_select %p232, %s21, 0
      %s234 = smul.addr %s231, 4
      %s235 = sadd.s32 %s233, %s234
      %s236 = smul.addr %s235, 8
      %s237 = scalar_lea.vmem %s5, %s236
      %p238 = scmp.lt.s32.totalorder %s20, 1
      %s239 = scalar_select %p238, %s20, 1
      %p240 = scmp.lt.s32.totalorder %s21, 0
      %s241 = scalar_select %p240, %s21, 0
      %s242 = sadd.s32 %s241, %s239
      %s243 = smul.addr %s242, 2
      %s244 = scalar_lea.vmem %s0, %s243
      %p245 = scmp.lt.s32.totalorder %s20, 1
      %s246 = scalar_select %p245, %s20, 1
      %p247 = scmp.lt.s32.totalorder %s21, 0
      %s248 = scalar_select %p247, %s21, 0
      %s249 = smul.addr %s246, 4
      %s250 = sadd.s32 %s248, %s249
      %s251 = smul.addr %s250, 8
      %s252 = scalar_lea.vmem %s5, %s251
      %v254 = vld [vmem:[%s244] sm:$0x3]
      %v255 = vld [vmem:[%s1] sm:$0xf]
      %v256 = vld [vmem:[%s1 + $0x4] sm:$0xf]
      %v257 = vld [vmem:[%s1 + $0x8] sm:$0xf]
      %v258 = vld [vmem:[%s1 + $0xc] sm:$0xf]
      %v259 = vld [vmem:[%s2] sm:$0xff]
      %v260 = vld [vmem:[%s2 + $0x8] sm:$0xff]
      %v261 = vld [vmem:[%s2 + $0x10] sm:$0xff]
      %v262 = vld [vmem:[%s2 + $0x18] sm:$0xff]
      %264 = vset.pattern.permute.xlu0 0
      %265 = vperm.xlu0 %264, %v259
      %v266 = vpop.permute.xlu0 %265
      %269 = vset.pattern.permute.xlu0 0
      %270 = vperm.xlu0 %269, %v260
      %v271 = vpop.permute.xlu0 %270
      %274 = vset.pattern.permute.xlu0 0
      %275 = vperm.xlu0 %274, %v261
      %v276 = vpop.permute.xlu0 %275
      %279 = vset.pattern.permute.xlu0 0
      %280 = vperm.xlu0 %279, %v262
      %v281 = vpop.permute.xlu0 %280
      %v287 = vunpack.c.l.b16 %v255
      %v288 = vunpack.c.l.b16 %v256
      %v289 = vunpack.c.l.b16 %v257
      %v290 = vunpack.c.l.b16 %v258
      %v291 = vpack.c.b16 %v288, %v287
      %v292 = vpack.c.b16 %v290, %v289
      %vm293 = vcmask 31744
      %v295 = vsel %vm293, %v291, 0
      %v298 = vsel %vm293, %v292, 0
      %vm300 = vcmask 1041408
      %v302 = vsel %vm300, %v254, 0
      %304 = vmatprep.subr.bf16.mxu0 0
      %305 = vmatpush1.bf16.msra.mxu0 0
      %306 = vmatprep.subr.bf16.mxu0 0
      %307 = vmatpush1.bf16.msra.mxu0 0
      %308 = vmatprep.subr.bf16.mxu0 0
      %309 = vmatpush1.bf16.msra.mxu0 0
      %310 = vmatprep.subr.bf16.mxu0 0
      %311 = vmatpush1.bf16.msra.mxu0 0
      %312 = vmatprep.subr.bf16.mxu0 0
      %313 = vmatpush1.bf16.msra.mxu0 0
      %314 = vmatprep.subr.bf16.mxu0 0
      %315 = vmatpush1.bf16.msra.mxu0 0
      %316 = vmatprep.subr.bf16.mxu0 0
      %317 = vmatpush1.bf16.msra.mxu0 0
      %318 = vmatprep.subr.bf16.mxu0 0
      %319 = vmatpush1.bf16.msra.mxu0 %v302
      %320 = vmatprep.subr.bf16.mxu0 0
      %321 = vmatpush2.bf16.msra.mxu0 0
      %322 = vmatprep.subr.bf16.mxu0 0
      %323 = vmatpush2.bf16.msra.mxu0 0
      %324 = vmatprep.subr.bf16.mxu0 0
      %325 = vmatpush2.bf16.msra.mxu0 0
      %326 = vmatprep.subr.bf16.mxu0 0
      %327 = vmatpush2.bf16.msra.mxu0 0
      %328 = vmatprep.subr.bf16.mxu0 0
      %329 = vmatpush2.bf16.msra.mxu0 0
      %330 = vmatprep.subr.bf16.mxu0 0
      %331 = vmatpush2.bf16.msra.mxu0 0
      %332 = vmatprep.subr.bf16.mxu0 0
      %333 = vmatpush2.bf16.msra.mxu0 0
      %334 = vmatprep.subr.bf16.mxu0 0
      %335 = vmatpush2.bf16.msra.mxu0 0
      %336 = vmatprep.mubr.bf16.mxu0 0
      %337 = vmatmul.mubr.bf16.gmra.mxu0 %v295
      %v338 = vpop.f32.mrf.mxu0
      %v339 = vadd.f32 %v266, %v338
      %v340 = vpop.f32.mrf.mxu0
      %v341 = vpop.f32.mrf.mxu0
      %v342 = vadd.f32 %v271, %v341
      %v343 = vpop.f32.mrf.mxu0
      %344 = vmatprep.mubr.bf16.mxu0 0
      %345 = vmatmul.mubr.bf16.gmra.mxu0 %v298
      %v346 = vpop.f32.mrf.mxu0
      %v347 = vadd.f32 %v276, %v346
      %v348 = vpop.f32.mrf.mxu0
      %v349 = vpop.f32.mrf.mxu0
      %v350 = vadd.f32 %v281, %v349
      %v351 = vpop.f32.mrf.mxu0
      %352 = vdwg.mxu0
      %v353 = vmax.f32 %v339, 0.0
      %v354 = vmax.f32 %v342, 0.0
      %v355 = vmax.f32 %v347, 0.0
      %v356 = vmax.f32 %v350, 0.0
      %v357 = vld [vmem:[%s3] sm:$0xf]
      %v358 = vld [vmem:[%s3 + $0x4] sm:$0xf]
      %v359 = vld [vmem:[%s3 + $0x8] sm:$0xf]
      %v360 = vld [vmem:[%s3 + $0xc] sm:$0xf]
      %v361 = vpack.c.bf16 %v354, %v353
      %v362 = vpack.c.bf16 %v356, %v355
      %v363 = vld [vmem:[%s4] sm:$0xff]
      %v364 = vld [vmem:[%s4 + $0x8] sm:$0xff]
      %v365 = vld [vmem:[%s4 + $0x10] sm:$0xff]
      %v366 = vld [vmem:[%s4 + $0x18] sm:$0xff]
      %368 = vset.pattern.permute.xlu0 0
      %369 = vperm.xlu0 %368, %v363
      %v370 = vpop.permute.xlu0 %369
      %373 = vset.pattern.permute.xlu0 0
      %374 = vperm.xlu0 %373, %v364
      %v375 = vpop.permute.xlu0 %374
      %378 = vset.pattern.permute.xlu0 0
      %379 = vperm.xlu0 %378, %v365
      %v380 = vpop.permute.xlu0 %379
      %383 = vset.pattern.permute.xlu0 0
      %384 = vperm.xlu0 %383, %v366
      %v385 = vpop.permute.xlu0 %384
      %v391 = vunpack.c.l.b16 %v357
      %v392 = vunpack.c.l.b16 %v358
      %v393 = vunpack.c.l.b16 %v359
      %v394 = vunpack.c.l.b16 %v360
      %v395 = vpack.c.b16 %v392, %v391
      %v396 = vpack.c.b16 %v394, %v393
      %vm397 = vcmask 261120
      %v399 = vsel %vm397, %v395, 0
      %v402 = vsel %vm397, %v396, 0
      %404 = vmatprep.subr.bf16.mxu0 0
      %405 = vmatpush1.bf16.msra.mxu0 0
      %406 = vmatprep.subr.bf16.mxu0 0
      %407 = vmatpush1.bf16.msra.mxu0 0
      %408 = vmatprep.subr.bf16.mxu0 0
      %409 = vmatpush1.bf16.msra.mxu0 0
      %410 = vmatprep.subr.bf16.mxu0 0
      %411 = vmatpush1.bf16.msra.mxu0 0
      %412 = vmatprep.subr.bf16.mxu0 0
      %413 = vmatpush1.bf16.msra.mxu0 0
      %414 = vmatprep.subr.bf16.mxu0 0
      %415 = vmatpush1.bf16.msra.mxu0 0
      %416 = vmatprep.subr.bf16.mxu0 0
      %417 = vmatpush1.bf16.msra.mxu0 %v362
      %418 = vmatprep.subr.bf16.mxu0 0
      %419 = vmatpush1.bf16.msra.mxu0 %v361
      %420 = vmatprep.subr.bf16.mxu0 0
      %421 = vmatpush2.bf16.msra.mxu0 0
      %422 = vmatprep.subr.bf16.mxu0 0
      %423 = vmatpush2.bf16.msra.mxu0 0
      %424 = vmatprep.subr.bf16.mxu0 0
      %425 = vmatpush2.bf16.msra.mxu0 0
      %426 = vmatprep.subr.bf16.mxu0 0
      %427 = vmatpush2.bf16.msra.mxu0 0
      %428 = vmatprep.subr.bf16.mxu0 0
      %429 = vmatpush2.bf16.msra.mxu0 0
      %430 = vmatprep.subr.bf16.mxu0 0
      %431 = vmatpush2.bf16.msra.mxu0 0
      %432 = vmatprep.subr.bf16.mxu0 0
      %433 = vmatpush2.bf16.msra.mxu0 0
      %434 = vmatprep.subr.bf16.mxu0 0
      %435 = vmatpush2.bf16.msra.mxu0 0
      %436 = vmatprep.mubr.bf16.mxu0 0
      %437 = vmatmul.mubr.bf16.gmra.mxu0 %v399
      %v438 = vpop.f32.mrf.mxu0
      %v439 = vadd.f32 %v370, %v438
      %v440 = vpop.f32.mrf.mxu0
      %v441 = vpop.f32.mrf.mxu0
      %v442 = vadd.f32 %v375, %v441
      %v443 = vpop.f32.mrf.mxu0
      %444 = vmatprep.mubr.bf16.mxu0 0
      %445 = vmatmul.mubr.bf16.gmra.mxu0 %v402
      %v446 = vpop.f32.mrf.mxu0
      %v447 = vadd.f32 %v380, %v446
      %v448 = vpop.f32.mrf.mxu0
      %v449 = vpop.f32.mrf.mxu0
      %v450 = vadd.f32 %v385, %v449
      %v451 = vpop.f32.mrf.mxu0
      %452 = vdwg.mxu0
      %vm453 = vcmask 64512
      %454 = vst.msk [vmem:[%s252] sm:$0xff] %vm453, %v439
      %455 = vst.msk [vmem:[%s252 + $0x8] sm:$0xff] %vm453, %v442
      %456 = vst.msk [vmem:[%s252 + $0x10] sm:$0xff] %vm453, %v447
      %457 = vst.msk [vmem:[%s252 + $0x18] sm:$0xff] %vm453, %v450
      %p458 = scmp.lt.s32.totalorder %s20, 1
      %s459 = scalar_select %p458, %s20, 1
      %p460 = scmp.lt.s32.totalorder %s21, 0
      %s461 = scalar_select %p460, %s21, 0
      %s462 = smul.addr %s459, 4
      %s463 = sadd.s32 %s461, %s462
      %s464 = smul.addr %s463, 8
      %s465 = scalar_lea.vmem %s5, %s464
      // Predicated region
      $region41: #{tpu_custom_call.1} parent=39 // pred_check
        %p466 = pneg %p160
      $region42: #{tpu_custom_call.1} parent=39 // pred_check_branch
        %468 = sbr.rel (%p466) target = $region44
      $region43: #{tpu_custom_call.1} parent=39 // pred_region
        _
      $region44: #{tpu_custom_call.1} parent=39 // pred_fallthru
        _
    $region40: #{tpu_custom_call.1} parent=5 // pred_fallthru
      _
    %p469 = scmp.le.s32.totalorder 2, %s11
    // Predicated region
    $region45: #{tpu_custom_call.1} parent=5 // pred_check
      %p470 = pneg %p469
    $region46: #{tpu_custom_call.1} parent=5 // pred_check_branch
      %472 = sbr.rel (%p470) target = $region48
    $region47: #{tpu_custom_call.1} parent=5 // pred_region
      %s473 = ssub.s32 %s11, 2
      // Predicated region
      $region49: #{tpu_custom_call.1} parent=47 // pred_check
        %p474 = pneg %p166
      $region50: #{tpu_custom_call.1} parent=47 // pred_check_branch
        %476 = sbr.rel (%p474) target = $region52
      $region51: #{tpu_custom_call.1} parent=47 // pred_region
        %p477 = scmp.lt.s32.totalorder %s22, 1
        %s478 = scalar_select %p477, %s22, 1
        %p479 = scmp.lt.s32.totalorder %s23, 0
        %s480 = scalar_select %p479, %s23, 0
        %s481 = smul.addr %s478, 4
        %s482 = sadd.s32 %s480, %s481
        %s483 = smul.addr %s482, 8
        %s484 = scalar_lea.vmem %s5, %s483
      $region52: #{tpu_custom_call.1} parent=47 // pred_fallthru
        _
    $region48: #{tpu_custom_call.1} parent=5 // pred_fallthru
      _
  $region6: #{tpu_custom_call.1} parent=0 // loop_footer
    %s15 = sadd.s32 1, %s11
  $region7: #{tpu_custom_call.1} parent=0 // loop_footer_branch
    %10 = sbr.rel target = $region3
  $region8: #{tpu_custom_call.1} parent=0 // loop_exit
    _

</llo_original>
